<compile_context>
chip_gen: v7x
topology: tpu7x:2x2x1
jax: 0.10.0
libtpu: 0.0.40
codegen_flags: <defaults>
</compile_context>

<pallas_src>
import functools

import numpy as np
import jax
import jax.numpy as jnp
from jax.experimental import pallas as pl
from jax.experimental.pallas import tpu as pltpu


_VMEM = pl.BlockSpec(memory_space=pltpu.MemorySpace.VMEM)


# ----------------------------------------------------------------------------
# Pallas kernels
# ----------------------------------------------------------------------------
def _encoder_attn_kernel(tok_ref, wct_ref, bc_ref, wqt_ref, bq_ref, wkt_ref,
                         bk_ref, out_ref, *, batch, hw, scale):
    """Encoder_Attentioner.forward, algebraically reduced.

    The PyTorch module builds w = (q @ k^T) * scale of shape (B*HW, B*HW) and,
    per image i, only uses the sum over all keys minus the sum over image i's
    own keys.  That equals q_i . (k_sum_all - k_sum_i), so no (N, N) matrix is
    materialized: three bf16 (N,C)@(C,C) MXU matmuls plus O(N*C) VPU work.
    """
    x = tok_ref[...]                                                    # (N, C) f32
    y = (jnp.dot(x.astype(jnp.bfloat16), wct_ref[...],
                 preferred_element_type=jnp.float32)
         + bc_ref[...] + x)                                             # conv + residual
    y_bf = y.astype(jnp.bfloat16)
    q = jnp.dot(y_bf, wqt_ref[...], preferred_element_type=jnp.float32) + bq_ref[...]
    k = jnp.dot(y_bf, wkt_ref[...], preferred_element_type=jnp.float32) + bk_ref[...]

    c = x.shape[-1]
    q_r = q.reshape(batch, hw, c)                                       # (B, HW, C)
    k_r = k.reshape(batch, hw, c)
    k_sum = jnp.sum(k_r, axis=1)                                        # (B, C)
    k_other = jnp.sum(k_sum, axis=0, keepdims=True) - k_sum             # (B, C)

    # scale / ((B-1)*HW) folded into one scalar multiply of the (B, HW) result.
    # (B == 1 is degenerate in the reference too; guard only the trace-time /0.)
    denom = float(max(batch - 1, 1) * hw)
    rep = jnp.sum(q_r * k_other[:, None, :], axis=-1) * (scale / denom)  # (B, HW)

    rep_min = jnp.min(rep, axis=-1, keepdims=True)
    rep_max = jnp.max(rep, axis=-1, keepdims=True)
    rep = (rep - rep_min) / (rep_max - rep_min)
    out_ref[...] = jax.nn.sigmoid((rep - 0.65) / 0.15)                  # one lane-dense store


def _resize_batched_kernel(x_ref, ah_ref, awt_ref, out_ref, *, batch):
    """Separable bilinear resize of the whole batch in one invocation:
    out[b] = A_h @ X[b] @ A_w^T."""
    ah = ah_ref[...]
    awt = awt_ref[...]
    for b in range(batch):
        tmp = jnp.dot(ah, x_ref[b], preferred_element_type=jnp.float32)
        out_ref[b] = jnp.dot(tmp, awt, preferred_element_type=jnp.float32)


def _caw_post_kernel(caw_ref, mh_ref, mwt_ref, ah_ref, awt_ref,
                     caw_img_ref, preds_ref, fgm_ref, scal_ref,
                     *, batch, th_val, th0, alpha_c, bm_bar):
    """Fused post-processing of the cross-attention weights.

    1) adaptive-threshold stats on the composed (P<-S<-P) resample of caw
    2) sel_th scalar (computed in-kernel, never round-tripped through HBM)
    3) full-resolution upsample, binarized preds and binarized fg-weight mask
    """
    mh = mh_ref[...]
    mwt = mwt_ref[...]
    acc = jnp.zeros((1, 1), jnp.float32)
    for b in range(batch):
        thm = jnp.dot(jnp.dot(mh, caw_ref[b], preferred_element_type=jnp.float32),
                      mwt, preferred_element_type=jnp.float32)          # (P, P)
        keep = thm >= th_val
        s = jnp.sum(jnp.where(keep, thm, 0.0), keepdims=True)           # (1, 1)
        cnt = jnp.sum(keep.astype(jnp.float32), keepdims=True)          # (1, 1)
        acc = acc + s / cnt       # NaN if nothing clears th_val — same as reference
    avg_tot_conf = acc / batch                                          # (1, 1)
    sel_th = th0 + alpha_c * (1.0 - avg_tot_conf - bm_bar)              # (1, 1)
    scal_ref[...] = jnp.concatenate([avg_tot_conf, sel_th], axis=1)     # (1, 2)

    # fg_wts_masked on the patch grid.
    fgm_ref[...] = jnp.where(caw_ref[...] >= sel_th, 1.0, 0.0)

    # Upsample to image resolution and binarize, without re-reading caw from HBM.
    ah = ah_ref[...]
    awt = awt_ref[...]
    for b in range(batch):
        img = jnp.dot(jnp.dot(ah, caw_ref[b], preferred_element_type=jnp.float32),
                      awt, preferred_element_type=jnp.float32)          # (S, S)
        caw_img_ref[b] = img
        preds_ref[b] = jnp.where(img >= sel_th, 1.0, 0.0)


# ----------------------------------------------------------------------------
# Wrappers around pallas_call
# ----------------------------------------------------------------------------
def encoder_attentioner(tokens, prep):
    """tokens: (B, HW, C) channels-last patch tokens -> (B, HW) cross-attn weights."""
    b, hw, c = tokens.shape
    scale = 1.0 / (c ** 0.5)
    flat = tokens.reshape(b * hw, c).astype(jnp.float32)
    # TODO(synk): at very large B*HW*C this whole-array kernel should be tiled
    # over the token axis (k-sum pass + q pass) to fit v7x's 64 MiB VMEM.
    kernel = functools.partial(_encoder_attn_kernel, batch=b, hw=hw, scale=scale)
    return pl.pallas_call(
        kernel,
        out_shape=jax.ShapeDtypeStruct((b, hw), jnp.float32),
        in_specs=[_VMEM] * 7,
        out_specs=_VMEM,
    )(flat, prep["wct"], prep["bc"], prep["wqt"], prep["bq"],
      prep["wkt"], prep["bk"])


def bilinear_resize_batched(x, ah, awt):
    """x: (B, H_in, W_in) -> (B, H_out, W_out) with precomputed bilinear operators."""
    b = x.shape[0]
    h_out, w_out = ah.shape[0], awt.shape[1]
    return pl.pallas_call(
        functools.partial(_resize_batched_kernel, batch=b),
        out_shape=jax.ShapeDtypeStruct((b, h_out, w_out), jnp.float32),
        in_specs=[_VMEM, _VMEM, _VMEM],
        out_specs=_VMEM,
    )(x, ah, awt)


def caw_postprocess(caw_patch, mh, mwt, ah, awt, *, th_val, th0, alpha_c, bm_bar):
    b, p, _ = caw_patch.shape
    s = ah.shape[0]
    kernel = functools.partial(_caw_post_kernel, batch=b, th_val=th_val,
                               th0=th0, alpha_c=alpha_c, bm_bar=bm_bar)
    return pl.pallas_call(
        kernel,
        out_shape=(jax.ShapeDtypeStruct((b, s, s), jnp.float32),   # caw_img
                   jax.ShapeDtypeStruct((b, s, s), jnp.float32),   # preds (binarized)
                   jax.ShapeDtypeStruct((b, p, p), jnp.float32),   # fg_wts_masked (patch)
                   jax.ShapeDtypeStruct((1, 2), jnp.float32)),     # [avg_tot_conf, sel_th]
        in_specs=[_VMEM] * 5,
        out_specs=(_VMEM, _VMEM, _VMEM, _VMEM),
    )(caw_patch, mh, mwt, ah, awt)


# ----------------------------------------------------------------------------
# Host-side constants / parameter prep
# ----------------------------------------------------------------------------
def _interp_matrix(n_out, n_in):
    """Bilinear (align_corners=True) resampling operator of shape (n_out, n_in)."""
    if n_out == 1:
        src = np.zeros((1,), np.float64)
    else:
        src = np.arange(n_out, dtype=np.float64) * (float(n_in - 1) / float(n_out - 1))
    lo = np.clip(np.floor(src).astype(np.int64), 0, max(n_in - 2, 0))
    frac = src - lo
    hi = np.minimum(lo + 1, n_in - 1)
    m = np.zeros((n_out, n_in), np.float64)
    m[np.arange(n_out), lo] += 1.0 - frac
    m[np.arange(n_out), hi] += frac
    return m


def init_encoder_attn_params(key, c):
    ks = jax.random.split(key, 6)
    s = 1.0 / (c ** 0.5)
    return {
        "w_conv": jax.random.normal(ks[0], (c, c), jnp.float32) * s,
        "b_conv": jax.random.normal(ks[1], (c,), jnp.float32) * s,
        "w_query": jax.random.normal(ks[2], (c, c), jnp.float32) * s,
        "b_query": jax.random.normal(ks[3], (c,), jnp.float32) * s,
        "w_key": jax.random.normal(ks[4], (c, c), jnp.float32) * s,
        "b_key": jax.random.normal(ks[5], (c,), jnp.float32) * s,
    }


def prepare_encoder_params(params):
    """One-time layout prep: transpose the 1x1-conv weights (so y = x @ W^T + b)
    and cast them to bf16 for the MXU; biases stay f32 broadcast rows."""
    c = params["w_conv"].shape[0]
    return {
        "wct": jnp.asarray(params["w_conv"].T, jnp.bfloat16),
        "bc": params["b_conv"].reshape(1, c).astype(jnp.float32),
        "wqt": jnp.asarray(params["w_query"].T, jnp.bfloat16),
        "bq": params["b_query"].reshape(1, c).astype(jnp.float32),
        "wkt": jnp.asarray(params["w_key"].T, jnp.bfloat16),
        "bk": params["b_key"].reshape(1, c).astype(jnp.float32),
    }


# ----------------------------------------------------------------------------
# SCoSPARC forward (train-mode path)
# ----------------------------------------------------------------------------
def scosparc_forward(x, patch_toks_group, self_attn_maps, prep_params, *,
                     num_patches, img_size,
                     th0=0.505, alpha_c=1.0, bm_bar=0.48, th_val=0.15):
    # TODO(synk): self_attention_module2 / model_dino (pretrained DINO ViT) has no
    # Pallas equivalent; its outputs (self_attn_maps, patch_toks_group) are taken
    # as inputs instead of being computed from `x`.
    del x
    b = patch_toks_group.shape[0]
    p = num_patches
    s = img_size
    a = self_attn_maps.shape[-1]
    tokens = patch_toks_group.reshape(b, p * p, -1)

    # Bilinear operators (square maps => height operator == width operator),
    # chained resizes composed offline with numpy (no runtime cost).
    ah_pa = _interp_matrix(p, a)          # A -> P
    ah_sp = _interp_matrix(s, p)          # P -> S
    ah_ps = _interp_matrix(p, s)          # S -> P
    sa = ah_sp @ ah_pa                    # composed A -> S
    du = ah_ps @ ah_sp                    # composed P -> S -> P (down ∘ up)
    ah_sa = jnp.asarray(sa, jnp.float32)
    awt_sa = jnp.asarray(sa.T, jnp.float32)
    mh = jnp.asarray(du, jnp.float32)
    mwt = jnp.asarray(du.T, jnp.float32)
    ah_img = jnp.asarray(ah_sp, jnp.float32)
    awt_img = jnp.asarray(ah_sp.T, jnp.float32)

    # self_attn_maps2 = interp(interp(sam, [P,P]), [S,S]) via one composed resize.
    sam_img = bilinear_resize_batched(self_attn_maps.astype(jnp.float32),
                                      ah_sa, awt_sa)                    # (B, S, S)

    # cross_attn_weights = self.encoder_attn(patch_toks2)
    caw_flat = encoder_attentioner(tokens, prep_params)                 # (B, P*P)
    caw_patch = caw_flat.reshape(b, p, p)

    # Fused: th-map stats -> sel_th -> upsample + binarize (image & patch grid).
    caw_img, preds_bin, fg_mask_patch, scal = caw_postprocess(
        caw_patch, mh, mwt, ah_img, awt_img,
        th_val=th_val, th0=th0, alpha_c=alpha_c, bm_bar=bm_bar)
    avg_tot_conf = scal[0, 0]
    sel_th = scal[0, 1]

    fg_wts = caw_flat[:, None, :]                                       # (B, 1, P*P)
    fg_wts_masked = fg_mask_patch.reshape(b, 1, p * p)
    caw = caw_img[:, None]                                              # (B, 1, S, S)
    preds_fin = preds_bin[:, None]

    # TODO(synk): get_embeddings / get_embeddings_mask / get_saliency are external,
    # undefined helpers, so fg_embeds / bg_embeds / fg_sal cannot be reproduced.
    # TODO(synk): test-mode cv2 resize, skimage blob labelling and CRF
    # post-processing have no Pallas equivalent.
    return {
        "preds_fin": preds_fin,
        "preds_fin_noncrf": caw,
        "caw": caw,
        "self_attn_maps2": sam_img[:, None],
        "fg_wts": fg_wts,
        "fg_wts_masked": fg_wts_masked,
        "fg_interim": preds_fin,
        "avg_tot_conf": avg_tot_conf,
        "sel_th": sel_th,
    }


if __name__ == "__main__":
    # Small-shape stand-ins for (224 image, 28x28 patches, 768 channels):
    B, P, C = 2, 8, 32          # batch, patches-per-side, token channels
    IMG = 32                    # full "image" resolution
    A = 16                      # raw self-attention map resolution

    key = jax.random.PRNGKey(0)
    kx, kt, ka, kp = jax.random.split(key, 4)
    x = jax.random.normal(kx, (B, 3, IMG, IMG), jnp.float32)            # DINO input only
    patch_toks_group = jax.random.normal(kt, (B, P * P, C), jnp.float32)
    self_attn_maps = jax.random.uniform(ka, (B, A, A), jnp.float32)
    params = init_encoder_attn_params(kp, C)
    prep = prepare_encoder_params(params)                               # transpose + bf16 once

    outs = scosparc_forward(x, patch_toks_group, self_attn_maps, prep,
                            num_patches=P, img_size=IMG)
    jax.block_until_ready(outs)
    print("KERNEL_OK")
</pallas_src>

<mosaic_0001>
module attributes {stable_mosaic.version = 11 : i64} {
  func.func @_resize_batched_kernel(%arg0: memref<2x16x16xf32, #tpu.memory_space<vmem>>, %arg1: memref<32x16xf32, #tpu.memory_space<vmem>>, %arg2: memref<16x32xf32, #tpu.memory_space<vmem>>, %arg3: memref<2x32x32xf32, #tpu.memory_space<vmem>>) attributes {dimension_semantics = [], scalar_prefetch = 0 : i64, scratch_operands = 0 : i64, tpu.core_type = #tpu.core_type<tc>} {
    %c0 = arith.constant 0 : index
    %c0_0 = arith.constant 0 : index
    %0 = vector.load %arg1[%c0, %c0_0] : memref<32x16xf32, #tpu.memory_space<vmem>>, vector<32x16xf32>
    %c0_1 = arith.constant 0 : index
    %c0_2 = arith.constant 0 : index
    %1 = vector.load %arg2[%c0_1, %c0_2] : memref<16x32xf32, #tpu.memory_space<vmem>>, vector<16x32xf32>
    %c0_3 = arith.constant 0 : index
    %c0_4 = arith.constant 0 : index
    %c0_5 = arith.constant 0 : index
    %2 = vector.load %arg0[%c0_3, %c0_4, %c0_5] : memref<2x16x16xf32, #tpu.memory_space<vmem>>, vector<1x16x16xf32>
    %3 = vector.shape_cast %2 : vector<1x16x16xf32> to vector<16x16xf32>
    %cst = arith.constant dense<0.000000e+00> : vector<32x16xf32>
    %4 = tpu.matmul %0, %3, %cst {dimension_numbers = #tpu.dot_dimension_numbers<[1], [0], [0], [1], [0, 0, 1, 1], [], []>} : vector<32x16xf32>, vector<16x16xf32>, vector<32x16xf32> -> vector<32x16xf32>
    %cst_6 = arith.constant dense<0.000000e+00> : vector<32x32xf32>
    %5 = tpu.matmul %4, %1, %cst_6 {dimension_numbers = #tpu.dot_dimension_numbers<[1], [0], [0], [1], [0, 0, 1, 1], [], []>} : vector<32x16xf32>, vector<16x32xf32>, vector<32x32xf32> -> vector<32x32xf32>
    %c0_7 = arith.constant 0 : index
    %c0_8 = arith.constant 0 : index
    %c0_9 = arith.constant 0 : index
    %6 = vector.load %arg3[%c0_7, %c0_8, %c0_9] : memref<2x32x32xf32, #tpu.memory_space<vmem>>, vector<1x32x32xf32>
    %7 = vector.shape_cast %6 : vector<1x32x32xf32> to vector<32x32xf32>
    %8 = vector.shape_cast %5 : vector<32x32xf32> to vector<1x32x32xf32>
    tpu.vector_store %arg3[%c0_7, %c0_8, %c0_9], %8 {strides = array<i32>} : memref<2x32x32xf32, #tpu.memory_space<vmem>>, vector<1x32x32xf32>,
    %c1 = arith.constant 1 : index
    %c0_10 = arith.constant 0 : index
    %c0_11 = arith.constant 0 : index
    %9 = vector.load %arg0[%c1, %c0_10, %c0_11] : memref<2x16x16xf32, #tpu.memory_space<vmem>>, vector<1x16x16xf32>
    %10 = vector.shape_cast %9 : vector<1x16x16xf32> to vector<16x16xf32>
    %cst_12 = arith.constant dense<0.000000e+00> : vector<32x16xf32>
    %11 = tpu.matmul %0, %10, %cst_12 {dimension_numbers = #tpu.dot_dimension_numbers<[1], [0], [0], [1], [0, 0, 1, 1], [], []>} : vector<32x16xf32>, vector<16x16xf32>, vector<32x16xf32> -> vector<32x16xf32>
    %cst_13 = arith.constant dense<0.000000e+00> : vector<32x32xf32>
    %12 = tpu.matmul %11, %1, %cst_13 {dimension_numbers = #tpu.dot_dimension_numbers<[1], [0], [0], [1], [0, 0, 1, 1], [], []>} : vector<32x16xf32>, vector<16x32xf32>, vector<32x32xf32> -> vector<32x32xf32>
    %c1_14 = arith.constant 1 : index
    %c0_15 = arith.constant 0 : index
    %c0_16 = arith.constant 0 : index
    %13 = vector.load %arg3[%c1_14, %c0_15, %c0_16] : memref<2x32x32xf32, #tpu.memory_space<vmem>>, vector<1x32x32xf32>
    %14 = vector.shape_cast %13 : vector<1x32x32xf32> to vector<32x32xf32>
    %15 = vector.shape_cast %12 : vector<32x32xf32> to vector<1x32x32xf32>
    tpu.vector_store %arg3[%c1_14, %c0_15, %c0_16], %15 {strides = array<i32>} : memref<2x32x32xf32, #tpu.memory_space<vmem>>, vector<1x32x32xf32>,
    return
  }
}

</mosaic_0001>

<llo_original>
// kernel: tpu_custom_call.1
$region0: #{tpu_custom_call.1}
  #allocation0 [shape = 'u32[]', space=smem, size = 0x4, offset = 0x4, fixed_abs, tag = 'smem constant byte address 0x4 - core index']
  #allocation1 [shape = 'u32[144,128]{1,0:T(1,128)}', space=vmem, size = 0x12000, scoped, tag = 'internal scratch']
  %s0 = inlined_call_operand.vmem [shape: f32[2,16,16], index: 0, kind: input, shape index: {}]
  %s1 = inlined_call_operand.vmem [shape: f32[32,16], index: 1, kind: input, shape index: {}]
  %s2 = inlined_call_operand.vmem [shape: f32[16,32], index: 2, kind: input, shape index: {}]
  %s3 = inlined_call_operand.hbm [shape: f32[2,32,32], index: 3, kind: output, shape index: {}]
  %s4 = sld [smem:[#allocation0]]
  $region22: #{tpu_custom_call.1} parent=0
    _
  %s6 = ssub.s32 1, %s4
  %s7 = scalar_select 0, %s6, %s4
  $region1: #{tpu_custom_call.1} parent=0
    #allocation2 [shape = 'u8[32768]{0}', space=vmem, size = 0x8000, scoped, tag = 'output window, operand 0, single buffered']
    #allocation3 [shape = 's32[1]{0}', space=sflag, size = 0x4, scoped, tag = 'scoped memory for tpu_custom_call.1']
    %8 = vsyncpa [#allocation3], 0
    // Predicated region
    $region2: #{tpu_custom_call.1} parent=1 // pred_check
      _
    $region3: #{tpu_custom_call.1} parent=1 // pred_check_branch
      %10 = sbr.rel (0) target = $region5
    $region4: #{tpu_custom_call.1} parent=1 // pred_region
      _
    $region5: #{tpu_custom_call.1} parent=1 // pred_fallthru
      _
    // Predicated region
    $region6: #{tpu_custom_call.1} parent=1 // pred_check
      _
    $region7: #{tpu_custom_call.1} parent=1 // pred_check_branch
      %12 = sbr.rel (0) target = $region9
    $region8: #{tpu_custom_call.1} parent=1 // pred_region
      _
    $region9: #{tpu_custom_call.1} parent=1 // pred_fallthru
      _
    // Predicated region
    $region10: #{tpu_custom_call.1} parent=1 // pred_check
      _
    $region11: #{tpu_custom_call.1} parent=1 // pred_check_branch
      %14 = sbr.rel (0) target = $region13
    $region12: #{tpu_custom_call.1} parent=1 // pred_region
      _
    $region13: #{tpu_custom_call.1} parent=1 // pred_fallthru
      _
    %v15 = vld [vmem:[%s1] sm:$0xff]
    %v16 = vld [vmem:[%s1 + $0x8] sm:$0xff]
    %v17 = vld [vmem:[%s1 + $0x10] sm:$0xff]
    %v18 = vld [vmem:[%s1 + $0x18] sm:$0xff]
    %v19 = vld [vmem:[%s2] sm:$0xff]
    %v20 = vld [vmem:[%s2 + $0x8] sm:$0xff]
    %v21 = vld [vmem:[%s0] sm:$0xff]
    %v22 = vld [vmem:[%s0 + $0x8] sm:$0xff]
    %vm23 = vcmask 130048
    %v25 = vsel %vm23, %v15, 0
    %v28 = vsel %vm23, %v16, 0
    %v31 = vsel %vm23, %v17, 0
    %v34 = vsel %vm23, %v18, 0
    %36 = vmatprep.subr.mxu0 0.0
    %37 = vmatpush1.msra.mxu0 %v21
    %38 = vmatprep.subr.mxu0 0.0
    %39 = vmatpush1.msra.mxu0 %v22
    %40 = vmatprep.subr.mxu0 0.0
    %41 = vmatpush1.msra.mxu0 0.0
    %42 = vmatprep.subr.mxu0 0.0
    %43 = vmatpush1.msra.mxu0 0.0
    %44 = vmatprep.subr.mxu0 0.0
    %45 = vmatpush1.msra.mxu0 0.0
    %46 = vmatprep.subr.mxu0 0.0
    %47 = vmatpush1.msra.mxu0 0.0
    %48 = vmatprep.subr.mxu0 0.0
    %49 = vmatpush1.msra.mxu0 0.0
    %50 = vmatprep.subr.mxu0 0.0
    %51 = vmatpush1.msra.mxu0 0.0
    %52 = vmatprep.subr.mxu0 0.0
    %53 = vmatpush1.msra.mxu0 0.0
    %54 = vmatprep.subr.mxu0 0.0
    %55 = vmatpush1.msra.mxu0 0.0
    %56 = vmatprep.subr.mxu0 0.0
    %57 = vmatpush1.msra.mxu0 0.0
    %58 = vmatprep.subr.mxu0 0.0
    %59 = vmatpush1.msra.mxu0 0.0
    %60 = vmatprep.subr.mxu0 0.0
    %61 = vmatpush1.msra.mxu0 0.0
    %62 = vmatprep.subr.mxu0 0.0
    %63 = vmatpush1.msra.mxu0 0.0
    %64 = vmatprep.subr.mxu0 0.0
    %65 = vmatpush1.msra.mxu0 0.0
    %66 = vmatprep.subr.mxu0 0.0
    %67 = vmatpush1.msra.mxu0 0.0
    %68 = vmatprep.subr.mxu0 0.0
    %69 = vmatpush1.msra.mxu0 0.0
    %70 = vmatprep.subr.mxu0 0.0
    %71 = vmatpush1.msra.mxu0 0.0
    %72 = vmatprep.subr.mxu0 0.0
    %73 = vmatpush1.msra.mxu0 0.0
    %74 = vmatprep.subr.mxu0 0.0
    %75 = vmatpush1.msra.mxu0 0.0
    %76 = vmatprep.subr.mxu0 0.0
    %77 = vmatpush1.msra.mxu0 0.0
    %78 = vmatprep.subr.mxu0 0.0
    %79 = vmatpush1.msra.mxu0 0.0
    %80 = vmatprep.subr.mxu0 0.0
    %81 = vmatpush1.msra.mxu0 0.0
    %82 = vmatprep.subr.mxu0 0.0
    %83 = vmatpush1.msra.mxu0 0.0
    %84 = vmatprep.subr.mxu0 0.0
    %85 = vmatpush1.msra.mxu0 0.0
    %86 = vmatprep.subr.mxu0 0.0
    %87 = vmatpush1.msra.mxu0 0.0
    %88 = vmatprep.subr.mxu0 0.0
    %89 = vmatpush1.msra.mxu0 0.0
    %90 = vmatprep.subr.mxu0 0.0
    %91 = vmatpush1.msra.mxu0 0.0
    %92 = vmatprep.subr.mxu0 0.0
    %93 = vmatpush1.msra.mxu0 0.0
    %94 = vmatprep.subr.mxu0 0.0
    %95 = vmatpush1.msra.mxu0 0.0
    %96 = vmatprep.subr.mxu0 0.0
    %97 = vmatpush1.msra.mxu0 0.0
    %98 = vmatprep.subr.mxu0 0.0
    %99 = vmatpush1.msra.mxu0 0.0
    %100 = vmatprep.mubr.f32.mxu0 0.0
    %101 = vmatmul.mubr.f32.gmra.mrb[0].mxu0 %v25
    %v102 = vpop.f32.mrb[0].mxu0
    %v103 = vadd.f32 0.0, %v102
    %v104 = vpop.f32.mrb[0].mxu0
    %105 = vmatprep.mubr.f32.mxu0 0.0
    %106 = vmatmul.mubr.f32.gmra.mrb[0].mxu0 %v28
    %v107 = vpop.f32.mrb[0].mxu0
    %v108 = vadd.f32 0.0, %v107
    %v109 = vpop.f32.mrb[0].mxu0
    %110 = vmatprep.mubr.f32.mxu0 0.0
    %111 = vmatmul.mubr.f32.gmra.mrb[0].mxu0 %v31
    %v112 = vpop.f32.mrb[0].mxu0
    %v113 = vadd.f32 0.0, %v112
    %v114 = vpop.f32.mrb[0].mxu0
    %115 = vmatprep.mubr.f32.mxu0 0.0
    %116 = vmatmul.mubr.f32.gmra.mrb[0].mxu0 %v34
    %v117 = vpop.f32.mrb[0].mxu0
    %v118 = vadd.f32 0.0, %v117
    %v119 = vpop.f32.mrb[0].mxu0
    %120 = vdwg.mxu0
    %v122 = vsel %vm23, %v103, 0
    %v125 = vsel %vm23, %v108, 0
    %v128 = vsel %vm23, %v113, 0
    %v131 = vsel %vm23, %v118, 0
    %133 = vmatprep.subr.mxu0 0.0
    %134 = vmatpush1.msra.mxu0 %v19
    %135 = vmatprep.subr.mxu0 0.0
    %136 = vmatpush1.msra.mxu0 %v20
    %137 = vmatprep.subr.mxu0 0.0
    %138 = vmatpush1.msra.mxu0 0.0
    %139 = vmatprep.subr.mxu0 0.0
    %140 = vmatpush1.msra.mxu0 0.0
    %141 = vmatprep.subr.mxu0 0.0
    %142 = vmatpush1.msra.mxu0 0.0
    %143 = vmatprep.subr.mxu0 0.0
    %144 = vmatpush1.msra.mxu0 0.0
    %145 = vmatprep.subr.mxu0 0.0
    %146 = vmatpush1.msra.mxu0 0.0
    %147 = vmatprep.subr.mxu0 0.0
    %148 = vmatpush1.msra.mxu0 0.0
    %149 = vmatprep.subr.mxu0 0.0
    %150 = vmatpush1.msra.mxu0 0.0
    %151 = vmatprep.subr.mxu0 0.0
    %152 = vmatpush1.msra.mxu0 0.0
    %153 = vmatprep.subr.mxu0 0.0
    %154 = vmatpush1.msra.mxu0 0.0
    %155 = vmatprep.subr.mxu0 0.0
    %156 = vmatpush1.msra.mxu0 0.0
    %157 = vmatprep.subr.mxu0 0.0
    %158 = vmatpush1.msra.mxu0 0.0
    %159 = vmatprep.subr.mxu0 0.0
    %160 = vmatpush1.msra.mxu0 0.0
    %161 = vmatprep.subr.mxu0 0.0
    %162 = vmatpush1.msra.mxu0 0.0
    %163 = vmatprep.subr.mxu0 0.0
    %164 = vmatpush1.msra.mxu0 0.0
    %165 = vmatprep.subr.mxu0 0.0
    %166 = vmatpush1.msra.mxu0 0.0
    %167 = vmatprep.subr.mxu0 0.0
    %168 = vmatpush1.msra.mxu0 0.0
    %169 = vmatprep.subr.mxu0 0.0
    %170 = vmatpush1.msra.mxu0 0.0
    %171 = vmatprep.subr.mxu0 0.0
    %172 = vmatpush1.msra.mxu0 0.0
    %173 = vmatprep.subr.mxu0 0.0
    %174 = vmatpush1.msra.mxu0 0.0
    %175 = vmatprep.subr.mxu0 0.0
    %176 = vmatpush1.msra.mxu0 0.0
    %177 = vmatprep.subr.mxu0 0.0
    %178 = vmatpush1.msra.mxu0 0.0
    %179 = vmatprep.subr.mxu0 0.0
    %180 = vmatpush1.msra.mxu0 0.0
    %181 = vmatprep.subr.mxu0 0.0
    %182 = vmatpush1.msra.mxu0 0.0
    %183 = vmatprep.subr.mxu0 0.0
    %184 = vmatpush1.msra.mxu0 0.0
    %185 = vmatprep.subr.mxu0 0.0
    %186 = vmatpush1.msra.mxu0 0.0
    %187 = vmatprep.subr.mxu0 0.0
    %188 = vmatpush1.msra.mxu0 0.0
    %189 = vmatprep.subr.mxu0 0.0
    %190 = vmatpush1.msra.mxu0 0.0
    %191 = vmatprep.subr.mxu0 0.0
    %192 = vmatpush1.msra.mxu0 0.0
    %193 = vmatprep.subr.mxu0 0.0
    %194 = vmatpush1.msra.mxu0 0.0
    %195 = vmatprep.subr.mxu0 0.0
    %196 = vmatpush1.msra.mxu0 0.0
    %197 = vmatprep.mubr.f32.mxu0 0.0
    %198 = vmatmul.mubr.f32.gmra.mrb[0].mxu0 %v122
    %v199 = vpop.f32.mrb[0].mxu0
    %v200 = vadd.f32 0.0, %v199
    %v201 = vpop.f32.mrb[0].mxu0
    %202 = vmatprep.mubr.f32.mxu0 0.0
    %203 = vmatmul.mubr.f32.gmra.mrb[0].mxu0 %v125
    %v204 = vpop.f32.mrb[0].mxu0
    %v205 = vadd.f32 0.0, %v204
    %v206 = vpop.f32.mrb[0].mxu0
    %207 = vmatprep.mubr.f32.mxu0 0.0
    %208 = vmatmul.mubr.f32.gmra.mrb[0].mxu0 %v128
    %v209 = vpop.f32.mrb[0].mxu0
    %v210 = vadd.f32 0.0, %v209
    %v211 = vpop.f32.mrb[0].mxu0
    %212 = vmatprep.mubr.f32.mxu0 0.0
    %213 = vmatmul.mubr.f32.gmra.mrb[0].mxu0 %v131
    %v214 = vpop.f32.mrb[0].mxu0
    %v215 = vadd.f32 0.0, %v214
    %v216 = vpop.f32.mrb[0].mxu0
    %217 = vdwg.mxu0
    %vm218 = vcmask 261120
    %219 = vst.msk [vmem:[#allocation2] sm:$0xff] %vm218, %v200
    %220 = vst.msk [vmem:[#allocation2 + $0x8] sm:$0xff] %vm218, %v205
    %221 = vst.msk [vmem:[#allocation2 + $0x10] sm:$0xff] %vm218, %v210
    %222 = vst.msk [vmem:[#allocation2 + $0x18] sm:$0xff] %vm218, %v215
    %s223 = scalar_lea.vmem %s0, 16
    %v224 = vld [vmem:[%s223] sm:$0xff]
    %v225 = vld [vmem:[%s223 + $0x8] sm:$0xff]
    %226 = vmatprep.subr.mxu0 0.0
    %227 = vmatpush1.msra.mxu0 %v224
    %228 = vmatprep.subr.mxu0 0.0
    %229 = vmatpush1.msra.mxu0 %v225
    %230 = vmatprep.subr.mxu0 0.0
    %231 = vmatpush1.msra.mxu0 0.0
    %232 = vmatprep.subr.mxu0 0.0
    %233 = vmatpush1.msra.mxu0 0.0
    %234 = vmatprep.subr.mxu0 0.0
    %235 = vmatpush1.msra.mxu0 0.0
    %236 = vmatprep.subr.mxu0 0.0
    %237 = vmatpush1.msra.mxu0 0.0
    %238 = vmatprep.subr.mxu0 0.0
    %239 = vmatpush1.msra.mxu0 0.0
    %240 = vmatprep.subr.mxu0 0.0
    %241 = vmatpush1.msra.mxu0 0.0
    %242 = vmatprep.subr.mxu0 0.0
    %243 = vmatpush1.msra.mxu0 0.0
    %244 = vmatprep.subr.mxu0 0.0
    %245 = vmatpush1.msra.mxu0 0.0
    %246 = vmatprep.subr.mxu0 0.0
    %247 = vmatpush1.msra.mxu0 0.0
    %248 = vmatprep.subr.mxu0 0.0
    %249 = vmatpush1.msra.mxu0 0.0
    %250 = vmatprep.subr.mxu0 0.0
    %251 = vmatpush1.msra.mxu0 0.0
    %252 = vmatprep.subr.mxu0 0.0
    %253 = vmatpush1.msra.mxu0 0.0
    %254 = vmatprep.subr.mxu0 0.0
    %255 = vmatpush1.msra.mxu0 0.0
    %256 = vmatprep.subr.mxu0 0.0
    %257 = vmatpush1.msra.mxu0 0.0
    %258 = vmatprep.subr.mxu0 0.0
    %259 = vmatpush1.msra.mxu0 0.0
    %260 = vmatprep.subr.mxu0 0.0
    %261 = vmatpush1.msra.mxu0 0.0
    %262 = vmatprep.subr.mxu0 0.0
    %263 = vmatpush1.msra.mxu0 0.0
    %264 = vmatprep.subr.mxu0 0.0
    %265 = vmatpush1.msra.mxu0 0.0
    %266 = vmatprep.subr.mxu0 0.0
    %267 = vmatpush1.msra.mxu0 0.0
    %268 = vmatprep.subr.mxu0 0.0
    %269 = vmatpush1.msra.mxu0 0.0
    %270 = vmatprep.subr.mxu0 0.0
    %271 = vmatpush1.msra.mxu0 0.0
    %272 = vmatprep.subr.mxu0 0.0
    %273 = vmatpush1.msra.mxu0 0.0
    %274 = vmatprep.subr.mxu0 0.0
    %275 = vmatpush1.msra.mxu0 0.0
    %276 = vmatprep.subr.mxu0 0.0
    %277 = vmatpush1.msra.mxu0 0.0
    %278 = vmatprep.subr.mxu0 0.0
    %279 = vmatpush1.msra.mxu0 0.0
    %280 = vmatprep.subr.mxu0 0.0
    %281 = vmatpush1.msra.mxu0 0.0
    %282 = vmatprep.subr.mxu0 0.0
    %283 = vmatpush1.msra.mxu0 0.0
    %284 = vmatprep.subr.mxu0 0.0
    %285 = vmatpush1.msra.mxu0 0.0
    %286 = vmatprep.subr.mxu0 0.0
    %287 = vmatpush1.msra.mxu0 0.0
    %288 = vmatprep.subr.mxu0 0.0
    %289 = vmatpush1.msra.mxu0 0.0
    %290 = vmatprep.mubr.f32.mxu0 0.0
    %291 = vmatmul.mubr.f32.gmra.mrb[0].mxu0 %v25
    %v292 = vpop.f32.mrb[0].mxu0
    %v293 = vadd.f32 0.0, %v292
    %v294 = vpop.f32.mrb[0].mxu0
    %295 = vmatprep.mubr.f32.mxu0 0.0
    %296 = vmatmul.mubr.f32.gmra.mrb[0].mxu0 %v28
    %v297 = vpop.f32.mrb[0].mxu0
    %v298 = vadd.f32 0.0, %v297
    %v299 = vpop.f32.mrb[0].mxu0
    %300 = vmatprep.mubr.f32.mxu0 0.0
    %301 = vmatmul.mubr.f32.gmra.mrb[0].mxu0 %v31
    %v302 = vpop.f32.mrb[0].mxu0
    %v303 = vadd.f32 0.0, %v302
    %v304 = vpop.f32.mrb[0].mxu0
    %305 = vmatprep.mubr.f32.mxu0 0.0
    %306 = vmatmul.mubr.f32.gmra.mrb[0].mxu0 %v34
    %v307 = vpop.f32.mrb[0].mxu0
    %v308 = vadd.f32 0.0, %v307
    %v309 = vpop.f32.mrb[0].mxu0
    %310 = vdwg.mxu0
    %v312 = vsel %vm23, %v293, 0
    %v315 = vsel %vm23, %v298, 0
    %v318 = vsel %vm23, %v303, 0
    %v321 = vsel %vm23, %v308, 0
    %323 = vmatprep.subr.mxu0 0.0
    %324 = vmatpush1.msra.mxu0 %v19
    %325 = vmatprep.subr.mxu0 0.0
    %326 = vmatpush1.msra.mxu0 %v20
    %327 = vmatprep.subr.mxu0 0.0
    %328 = vmatpush1.msra.mxu0 0.0
    %329 = vmatprep.subr.mxu0 0.0
    %330 = vmatpush1.msra.mxu0 0.0
    %331 = vmatprep.subr.mxu0 0.0
    %332 = vmatpush1.msra.mxu0 0.0
    %333 = vmatprep.subr.mxu0 0.0
    %334 = vmatpush1.msra.mxu0 0.0
    %335 = vmatprep.subr.mxu0 0.0
    %336 = vmatpush1.msra.mxu0 0.0
    %337 = vmatprep.subr.mxu0 0.0
    %338 = vmatpush1.msra.mxu0 0.0
    %339 = vmatprep.subr.mxu0 0.0
    %340 = vmatpush1.msra.mxu0 0.0
    %341 = vmatprep.subr.mxu0 0.0
    %342 = vmatpush1.msra.mxu0 0.0
    %343 = vmatprep.subr.mxu0 0.0
    %344 = vmatpush1.msra.mxu0 0.0
    %345 = vmatprep.subr.mxu0 0.0
    %346 = vmatpush1.msra.mxu0 0.0
    %347 = vmatprep.subr.mxu0 0.0
    %348 = vmatpush1.msra.mxu0 0.0
    %349 = vmatprep.subr.mxu0 0.0
    %350 = vmatpush1.msra.mxu0 0.0
    %351 = vmatprep.subr.mxu0 0.0
    %352 = vmatpush1.msra.mxu0 0.0
    %353 = vmatprep.subr.mxu0 0.0
    %354 = vmatpush1.msra.mxu0 0.0
    %355 = vmatprep.subr.mxu0 0.0
    %356 = vmatpush1.msra.mxu0 0.0
    %357 = vmatprep.subr.mxu0 0.0
    %358 = vmatpush1.msra.mxu0 0.0
    %359 = vmatprep.subr.mxu0 0.0
    %360 = vmatpush1.msra.mxu0 0.0
    %361 = vmatprep.subr.mxu0 0.0
    %362 = vmatpush1.msra.mxu0 0.0
    %363 = vmatprep.subr.mxu0 0.0
    %364 = vmatpush1.msra.mxu0 0.0
    %365 = vmatprep.subr.mxu0 0.0
    %366 = vmatpush1.msra.mxu0 0.0
    %367 = vmatprep.subr.mxu0 0.0
    %368 = vmatpush1.msra.mxu0 0.0
    %369 = vmatprep.subr.mxu0 0.0
    %370 = vmatpush1.msra.mxu0 0.0
    %371 = vmatprep.subr.mxu0 0.0
    %372 = vmatpush1.msra.mxu0 0.0
    %373 = vmatprep.subr.mxu0 0.0
    %374 = vmatpush1.msra.mxu0 0.0
    %375 = vmatprep.subr.mxu0 0.0
    %376 = vmatpush1.msra.mxu0 0.0
    %377 = vmatprep.subr.mxu0 0.0
    %378 = vmatpush1.msra.mxu0 0.0
    %379 = vmatprep.subr.mxu0 0.0
    %380 = vmatpush1.msra.mxu0 0.0
    %381 = vmatprep.subr.mxu0 0.0
    %382 = vmatpush1.msra.mxu0 0.0
    %383 = vmatprep.subr.mxu0 0.0
    %384 = vmatpush1.msra.mxu0 0.0
    %385 = vmatprep.subr.mxu0 0.0
    %386 = vmatpush1.msra.mxu0 0.0
    %387 = vmatprep.mubr.f32.mxu0 0.0
    %388 = vmatmul.mubr.f32.gmra.mrb[0].mxu0 %v312
    %v389 = vpop.f32.mrb[0].mxu0
    %v390 = vadd.f32 0.0, %v389
    %v391 = vpop.f32.mrb[0].mxu0
    %392 = vmatprep.mubr.f32.mxu0 0.0
    %393 = vmatmul.mubr.f32.gmra.mrb[0].mxu0 %v315
    %v394 = vpop.f32.mrb[0].mxu0
    %v395 = vadd.f32 0.0, %v394
    %v396 = vpop.f32.mrb[0].mxu0
    %397 = vmatprep.mubr.f32.mxu0 0.0
    %398 = vmatmul.mubr.f32.gmra.mrb[0].mxu0 %v318
    %v399 = vpop.f32.mrb[0].mxu0
    %v400 = vadd.f32 0.0, %v399
    %v401 = vpop.f32.mrb[0].mxu0
    %402 = vmatprep.mubr.f32.mxu0 0.0
    %403 = vmatmul.mubr.f32.gmra.mrb[0].mxu0 %v321
    %v404 = vpop.f32.mrb[0].mxu0
    %v405 = vadd.f32 0.0, %v404
    %v406 = vpop.f32.mrb[0].mxu0
    %407 = vdwg.mxu0
    %s408 = scalar_lea.vmem [#allocation2], 32
    %409 = vst.msk [vmem:[%s408] sm:$0xff] %vm218, %v390
    %410 = vst.msk [vmem:[%s408 + $0x8] sm:$0xff] %vm218, %v395
    %411 = vst.msk [vmem:[%s408 + $0x10] sm:$0xff] %vm218, %v400
    %412 = vst.msk [vmem:[%s408 + $0x18] sm:$0xff] %vm218, %v405
    // Predicated region
    $region14: #{tpu_custom_call.1} parent=1 // pred_check
      _
    $region15: #{tpu_custom_call.1} parent=1 // pred_check_branch
      %414 = sbr.rel (0) target = $region17
    $region16: #{tpu_custom_call.1} parent=1 // pred_region
      %s416 = ssub.s32 1024, 1024
      %417 = vsyncadd [#allocation3], %s416
      %s418 = sshll.u32 [#allocation2], 4
      %s419 = int_to_ptr.vmem [resolvable:$true] %s418
      %424 = dma.vmem_to_hbm [thread:$0]  %s419, 1024, %s3, [#allocation3], 128, 128, 8
    $region17: #{tpu_custom_call.1} parent=1 // pred_fallthru
      _
    // Predicated region
    $region18: #{tpu_custom_call.1} parent=1 // pred_check
      _
    $region19: #{tpu_custom_call.1} parent=1 // pred_check_branch
      %426 = sbr.rel (0) target = $region21
    $region20: #{tpu_custom_call.1} parent=1 // pred_region
      %427 = dma.done [#allocation3], 1024
    $region21: #{tpu_custom_call.1} parent=1 // pred_fallthru
      _
    %428 = vsyncpa [#allocation3], 1

</llo_original>
